<compile_context>
chip_gen: v6e
topology: v6e:2x2x1
jax: 0.10.0
libtpu: 0.0.40
codegen_flags: <defaults>
</compile_context>

<pallas_src>
import functools

import jax
import jax.numpy as jnp
from jax.experimental import pallas as pl
from jax.experimental.pallas import tpu as pltpu


_VMEM_BUDGET = 40 * 1024 * 1024     # tile-planning target (fits v7x 64 MiB)
_VMEM_LIMIT = 48 * 1024 * 1024      # scoped VMEM request (headroom on v7x)


# ----------------------------- tiling helpers -------------------------------

def _round_up(x, m):
    return (x + m - 1) // m * m


def _pick_tile(dim, target, granule):
    """Largest tile <= target that divides dim and is a multiple of granule,
    falling back to the full dim (always legal: block == full array dim)."""
    if dim <= target:
        return dim
    t = (target // granule) * granule
    while t >= granule:
        if dim % t == 0:
            return t
        t -= granule
    return dim


def _plan_linear_tiles(M, N, K, out_bytes):
    """Pick (tm, tn, tk) preferring full-K, fat N, under the VMEM budget."""
    tm = _pick_tile(M, 256, 8)
    for tn_target in (1024, 768, 512, 384, 256, 128):
        tn = _pick_tile(N, tn_target, 128)
        for tk_target in (K, 2048, 1024, 512, 256, 128):
            tk = _pick_tile(K, min(tk_target, K), 128)
            need = (2 * tm * tk * 2            # x blocks (bf16, double-buffered)
                    + 2 * tk * tn * 2          # w blocks
                    + 2 * tm * tn * out_bytes  # out blocks
                    + 2 * tm * tn * 2          # residual blocks (worst case)
                    + tm * tn * 4              # f32 accumulator scratch
                    + 2 * tn * 4)              # bias
            if need <= _VMEM_BUDGET:
                return tm, tn, tk
    return tm, _pick_tile(N, 128, 128), _pick_tile(K, 128, 128)


# ----------------------------- Pallas kernels --------------------------------

def _layernorm_kernel(x_ref, g_ref, b_ref, o_ref):
    x = x_ref[...].astype(jnp.float32)                      # (tm, D)
    mean = jnp.mean(x, axis=-1, keepdims=True)
    var = jnp.mean(jnp.square(x - mean), axis=-1, keepdims=True)
    y = (x - mean) * jax.lax.rsqrt(var + 1e-5)
    o_ref[...] = (y * g_ref[...] + b_ref[...]).astype(o_ref.dtype)


def _linear_epilogue(y, b_ref, r_ref, gelu):
    # f32 epilogue (v5e has no bf16 VALU/EUP path).
    if b_ref is not None:
        y = y + b_ref[...].astype(jnp.float32)
    if gelu:
        y = 0.5 * y * (1.0 + jnp.tanh(
            0.7978845608028654 * (y + 0.044715 * y * y * y)))
    if r_ref is not None:
        y = y + r_ref[...].astype(jnp.float32)
    return y


def _make_linear_kernel_single_k(*, gelu, has_bias, has_residual, transpose_w):
    """Whole-K matmul: no accumulator scratch, no init/finalize branches."""
    def kernel(*refs):
        x_ref, w_ref = refs[0], refs[1]
        pos = 2
        b_ref = r_ref = None
        if has_bias:
            b_ref = refs[pos]; pos += 1
        if has_residual:
            r_ref = refs[pos]; pos += 1
        o_ref = refs[pos]

        x = x_ref[...]                                       # bf16 (tm, K)
        w = w_ref[...]                                       # bf16
        if transpose_w:
            y = jax.lax.dot_general(x, w, (((1,), (1,)), ((), ())),
                                    preferred_element_type=jnp.float32)
        else:
            y = jnp.dot(x, w, preferred_element_type=jnp.float32)
        o_ref[...] = _linear_epilogue(y, b_ref, r_ref, gelu).astype(o_ref.dtype)
    return kernel


def _make_linear_kernel_multi_k(*, gelu, has_bias, has_residual, transpose_w):
    """Tiled K-reduction matmul with f32 VMEM accumulator."""
    def kernel(*refs):
        x_ref, w_ref = refs[0], refs[1]
        pos = 2
        b_ref = r_ref = None
        if has_bias:
            b_ref = refs[pos]; pos += 1
        if has_residual:
            r_ref = refs[pos]; pos += 1
        o_ref = refs[pos]
        acc_ref = refs[pos + 1]

        k = pl.program_id(2)

        @pl.when(k == 0)
        def _():
            acc_ref[...] = jnp.zeros_like(acc_ref)

        x = x_ref[...]                                       # bf16 (tm, tk)
        w = w_ref[...]                                       # bf16
        if transpose_w:
            acc_ref[...] += jax.lax.dot_general(
                x, w, (((1,), (1,)), ((), ())),
                preferred_element_type=jnp.float32)
        else:
            acc_ref[...] += jnp.dot(x, w, preferred_element_type=jnp.float32)

        @pl.when(k == pl.num_programs(2) - 1)
        def _():
            y = _linear_epilogue(acc_ref[...], b_ref, r_ref, gelu)
            o_ref[...] = y.astype(o_ref.dtype)
    return kernel


def _flash_attn_kernel(q_ref, k_ref, v_ref, o_ref, m_sc, l_sc, acc_sc,
                       *, n_head, causal):
    """Flash-style attention.  Blocks: q (1,tq,D), k/v (1,ts,D), out (1,tq,D).
    Grid = (B, T//tq, S//ts); S axis is the sequential reduction axis.
    Scale is folded into the Q projection weights."""
    si = pl.program_id(2)

    @pl.when(si == 0)
    def _():
        m_sc[...] = jnp.full_like(m_sc, -jnp.inf)
        l_sc[...] = jnp.zeros_like(l_sc)
        acc_sc[...] = jnp.zeros_like(acc_sc)

    q = q_ref[0]                                             # (tq, D) bf16
    k = k_ref[0]                                             # (ts, D) bf16
    v = v_ref[0]                                             # (ts, D) bf16
    tq, D = q.shape
    ts = k.shape[0]
    dh = D // n_head

    if causal:
        qi = pl.program_id(1)
        row = qi * tq + jax.lax.broadcasted_iota(jnp.int32, (tq, ts), 0)
        col = si * ts + jax.lax.broadcasted_iota(jnp.int32, (tq, ts), 1)
        # finite large-negative so fully-masked blocks underflow to 0, no NaN
        neg = jnp.where(col > row, -1e30, 0.0).astype(jnp.float32)

    for h in range(n_head):
        sl = slice(h * dh, (h + 1) * dh)
        # contract on the last dims: no explicit transpose of the (ts, dh) block
        s = jax.lax.dot_general(q[:, sl], k[:, sl],
                                (((1,), (1,)), ((), ())),
                                preferred_element_type=jnp.float32)  # (tq, ts)
        if causal:
            s = s + neg
        m_prev = m_sc[h]                                     # (tq, 1)
        m_new = jnp.maximum(m_prev, jnp.max(s, axis=-1, keepdims=True))
        a = jnp.exp(m_prev - m_new)                          # (tq, 1)
        p = jnp.exp(s - m_new)                               # (tq, ts)
        l_sc[h] = a * l_sc[h] + jnp.sum(p, axis=-1, keepdims=True)
        acc_sc[h] = a * acc_sc[h] + jnp.dot(
            p.astype(jnp.bfloat16), v[:, sl],
            preferred_element_type=jnp.float32)
        m_sc[h] = m_new

    @pl.when(si == pl.num_programs(2) - 1)
    def _():
        for h in range(n_head):
            sl = slice(h * dh, (h + 1) * dh)
            inv = pl.reciprocal(l_sc[h], approx=True)        # (tq, 1)
            o_ref[0, :, sl] = (acc_sc[h] * inv).astype(o_ref.dtype)


# ----------------------------- kernel wrappers -------------------------------

def pallas_layernorm(x2d, g, b):
    M, D = x2d.shape
    tm = _pick_tile(M, 512, 8)
    return pl.pallas_call(
        _layernorm_kernel,
        out_shape=jax.ShapeDtypeStruct((M, D), x2d.dtype),
        grid=(M // tm,),
        in_specs=[pl.BlockSpec((tm, D), lambda i: (i, 0)),
                  pl.BlockSpec((1, D), lambda i: (0, 0)),
                  pl.BlockSpec((1, D), lambda i: (0, 0))],
        out_specs=pl.BlockSpec((tm, D), lambda i: (i, 0)),
        compiler_params=pltpu.CompilerParams(
            dimension_semantics=("parallel",),
            vmem_limit_bytes=_VMEM_LIMIT),
    )(x2d, g.reshape(1, D), b.reshape(1, D))


def pallas_linear(x2d, w, b=None, *, gelu=False, residual=None,
                  transpose_w=False, out_dtype=jnp.bfloat16):
    """y = x @ W (+ bias) (+ gelu) (+ residual).  W is (K, N), or (N, K) when
    transpose_w=True (contraction on the last dim of both operands)."""
    M, K = x2d.shape
    if transpose_w:
        N, Kw = w.shape
    else:
        Kw, N = w.shape
    assert Kw == K, (w.shape, x2d.shape)

    out_bytes = jnp.dtype(out_dtype).itemsize
    tm, tn, tk = _plan_linear_tiles(M, N, K, out_bytes)
    single_k = (tk == K)

    cost = pl.CostEstimate(
        flops=2 * M * N * K,
        transcendentals=(M * N) if gelu else 0,
        bytes_accessed=(M * K * x2d.dtype.itemsize + K * N * w.dtype.itemsize
                        + M * N * out_bytes))

    if single_k:
        in_specs = [pl.BlockSpec((tm, K), lambda i, j: (i, 0))]
        if transpose_w:
            in_specs.append(pl.BlockSpec((tn, K), lambda i, j: (j, 0)))
        else:
            in_specs.append(pl.BlockSpec((K, tn), lambda i, j: (0, j)))
        args = [x2d, w]
        if b is not None:
            in_specs.append(pl.BlockSpec((1, tn), lambda i, j: (0, j)))
            args.append(b.reshape(1, N))
        if residual is not None:
            in_specs.append(pl.BlockSpec((tm, tn), lambda i, j: (i, j)))
            args.append(residual)
        kern = _make_linear_kernel_single_k(
            gelu=gelu, has_bias=b is not None,
            has_residual=residual is not None, transpose_w=transpose_w)
        return pl.pallas_call(
            kern,
            out_shape=jax.ShapeDtypeStruct((M, N), out_dtype),
            grid=(M // tm, N // tn),
            in_specs=in_specs,
            out_specs=pl.BlockSpec((tm, tn), lambda i, j: (i, j)),
            compiler_params=pltpu.CompilerParams(
                dimension_semantics=("parallel", "parallel"),
                vmem_limit_bytes=_VMEM_LIMIT),
            cost_estimate=cost,
        )(*args)

    # multi-K fallback (K-reduction with f32 accumulator)
    in_specs = [pl.BlockSpec((tm, tk), lambda i, j, k: (i, k))]
    if transpose_w:
        in_specs.append(pl.BlockSpec((tn, tk), lambda i, j, k: (j, k)))
    else:
        in_specs.append(pl.BlockSpec((tk, tn), lambda i, j, k: (k, j)))
    args = [x2d, w]
    if b is not None:
        in_specs.append(pl.BlockSpec((1, tn), lambda i, j, k: (0, j)))
        args.append(b.reshape(1, N))
    if residual is not None:
        in_specs.append(pl.BlockSpec((tm, tn), lambda i, j, k: (i, j)))
        args.append(residual)
    kern = _make_linear_kernel_multi_k(
        gelu=gelu, has_bias=b is not None,
        has_residual=residual is not None, transpose_w=transpose_w)
    return pl.pallas_call(
        kern,
        out_shape=jax.ShapeDtypeStruct((M, N), out_dtype),
        grid=(M // tm, N // tn, K // tk),
        in_specs=in_specs,
        out_specs=pl.BlockSpec((tm, tn), lambda i, j, k: (i, j)),
        scratch_shapes=[pltpu.VMEM((tm, tn), jnp.float32)],
        compiler_params=pltpu.CompilerParams(
            dimension_semantics=("parallel", "parallel", "arbitrary"),
            vmem_limit_bytes=_VMEM_LIMIT),
        cost_estimate=cost,
    )(*args)


def pallas_attention(q, k, v, n_head, causal):
    """q: (B, T, D) bf16, k/v: (B, S, D) bf16 -> (B, T, D) bf16.
    Scale already folded into the Q projection weights."""
    B, T, D = q.shape
    S = k.shape[1]
    tq = _pick_tile(T, 128, 8)
    ts = _pick_tile(S, 512, 8)
    kern = functools.partial(_flash_attn_kernel, n_head=n_head, causal=causal)
    return pl.pallas_call(
        kern,
        out_shape=jax.ShapeDtypeStruct((B, T, D), q.dtype),
        grid=(B, T // tq, S // ts),
        in_specs=[pl.BlockSpec((1, tq, D), lambda b, qi, si: (b, qi, 0)),
                  pl.BlockSpec((1, ts, D), lambda b, qi, si: (b, si, 0)),
                  pl.BlockSpec((1, ts, D), lambda b, qi, si: (b, si, 0))],
        out_specs=pl.BlockSpec((1, tq, D), lambda b, qi, si: (b, qi, 0)),
        scratch_shapes=[pltpu.VMEM((n_head, tq, 1), jnp.float32),
                        pltpu.VMEM((n_head, tq, 1), jnp.float32),
                        pltpu.VMEM((n_head, tq, D // n_head), jnp.float32)],
        compiler_params=pltpu.CompilerParams(
            dimension_semantics=("parallel", "parallel", "arbitrary"),
            vmem_limit_bytes=_VMEM_LIMIT),
        cost_estimate=pl.CostEstimate(
            flops=4 * B * T * S * D,
            transcendentals=B * n_head * T * S,
            bytes_accessed=2 * (2 * B * T * D + 2 * B * S * D)),
    )(q, k, v)


# ----------------------------- model glue ------------------------------------

def self_attention_block(x_norm, p, n_head, B, T, residual2d):
    D = residual2d.shape[-1]
    qkv = pallas_linear(x_norm, p["wqkv"], p["bqkv"])        # (B*T, 3D) bf16
    q = qkv[:, :D].reshape(B, T, D)
    k = qkv[:, D:2 * D].reshape(B, T, D)
    v = qkv[:, 2 * D:].reshape(B, T, D)
    o = pallas_attention(q, k, v, n_head, causal=True)
    return pallas_linear(o.reshape(-1, D), p["wo"], p["bo"], residual=residual2d)


def cross_attention_block(x_norm, xa, p, n_head, B, T, residual2d):
    D = residual2d.shape[-1]
    S = xa.shape[1]
    q = pallas_linear(x_norm, p["wq"], p["bq"]).reshape(B, T, D)
    # TODO(synk): kv_cache path not implemented — cross K/V of xa are
    # recomputed each forward; cache them when adding incremental decode.
    kv = pallas_linear(xa.reshape(-1, D), p["wkv"], p["bkv"])  # (B*S, 2D) bf16
    k = kv[:, :D].reshape(B, S, D)
    v = kv[:, D:].reshape(B, S, D)
    o = pallas_attention(q, k, v, n_head, causal=False)
    return pallas_linear(o.reshape(-1, D), p["wo"], p["bo"], residual=residual2d)


def residual_attention_block(x2d, xa, p, n_head, B, T):
    o = pallas_layernorm(x2d, p["ln1_g"], p["ln1_b"])
    x2d = self_attention_block(o, p["attn"], n_head, B, T, x2d)
    o = pallas_layernorm(x2d, p["ln2_g"], p["ln2_b"])
    x2d = cross_attention_block(o, xa, p["cross"], n_head, B, T, x2d)
    o = pallas_layernorm(x2d, p["ln3_g"], p["ln3_b"])
    h = pallas_linear(o, p["w1"], p["b1"], gelu=True)        # bf16 (M, 4D)
    x2d = pallas_linear(h, p["w2"], p["b2"], residual=x2d)
    return x2d


def text_decoder_forward(tokens, xa, dparams, n_head):
    """
    tokens:  (B, T) int32 text tokens
    xa:      (B, S_audio, n_state) encoded audio features
    dparams: output of prepare_params()
    returns logits: (B, T, n_vocab) float32
    """
    # TODO(synk): kv_cache / offset path not implemented (offset fixed to 0).
    B, T = tokens.shape
    V = dparams["n_vocab"]
    D = dparams["tok_emb_pad"].shape[1]

    x = dparams["tok_emb_pad"][tokens] + dparams["pos_emb"][:T]   # (B,T,D) bf16
    x2d = x.reshape(-1, D)
    xa_bf = xa.astype(jnp.bfloat16)

    for blk in dparams["blocks"]:
        x2d = residual_attention_block(x2d, xa_bf, blk, n_head, B, T)

    x2d = pallas_layernorm(x2d, dparams["ln_g"], dparams["ln_b"])
    # tied-embedding logits: contract on D in-kernel (weight kept (V_pad, D)),
    # vocab padded to a multiple of 128 so the GEMM tiles normally.
    logits = pallas_linear(x2d, dparams["tok_emb_pad"], transpose_w=True,
                           out_dtype=jnp.float32)                 # (B*T, V_pad)
    return logits[:, :V].reshape(B, T, V)


# ----------------------------- parameters ------------------------------------

def init_params(key, n_vocab, n_ctx, n_state, n_layer):
    """f32, PyTorch-like layout (weights are (D_in, D_out))."""
    keys = iter(jax.random.split(key, 16 + 12 * n_layer))

    def w(shape, scale=0.02):
        return jax.random.normal(next(keys), shape, jnp.float32) * scale

    def mha_params():
        return dict(
            wq=w((n_state, n_state)), bq=jnp.zeros((n_state,), jnp.float32),
            wk=w((n_state, n_state)),                        # key has no bias
            wv=w((n_state, n_state)), bv=jnp.zeros((n_state,), jnp.float32),
            wo=w((n_state, n_state)), bo=jnp.zeros((n_state,), jnp.float32),
        )

    blocks = []
    for _ in range(n_layer):
        blocks.append(dict(
            attn=mha_params(),
            ln1_g=jnp.ones((n_state,), jnp.float32), ln1_b=jnp.zeros((n_state,), jnp.float32),
            cross=mha_params(),
            ln2_g=jnp.ones((n_state,), jnp.float32), ln2_b=jnp.zeros((n_state,), jnp.float32),
            w1=w((n_state, 4 * n_state)), b1=jnp.zeros((4 * n_state,), jnp.float32),
            w2=w((4 * n_state, n_state)), b2=jnp.zeros((n_state,), jnp.float32),
            ln3_g=jnp.ones((n_state,), jnp.float32), ln3_b=jnp.zeros((n_state,), jnp.float32),
        ))

    return dict(
        tok_emb=w((n_vocab, n_state)),
        pos_emb=w((n_ctx, n_state)),
        blocks=blocks,
        ln_g=jnp.ones((n_state,), jnp.float32),
        ln_b=jnp.zeros((n_state,), jnp.float32),
    )


def prepare_params(params, n_head):
    """Convert to the bf16, fused device layout:
       - weights bf16 in HBM (biases / LN params stay f32 for the f32 epilogue)
       - attention scale folded into wq / bq
       - fused QKV (self) and KV (cross) projection weights
       - tok_emb zero-padded to a multiple of 128 rows for the logits matmul."""
    bf = lambda a: a.astype(jnp.bfloat16)
    V, D = params["tok_emb"].shape
    scale = float(D // n_head) ** -0.5
    v_pad = _round_up(V, 128)
    tok_pad = jnp.zeros((v_pad, D), jnp.float32).at[:V].set(params["tok_emb"])

    def prep_self(p):
        wqkv = jnp.concatenate([p["wq"] * scale, p["wk"], p["wv"]], axis=1)
        bqkv = jnp.concatenate([p["bq"] * scale,
                                jnp.zeros((D,), jnp.float32), p["bv"]])
        return dict(wqkv=bf(wqkv), bqkv=bqkv, wo=bf(p["wo"]), bo=p["bo"])

    def prep_cross(p):
        wkv = jnp.concatenate([p["wk"], p["wv"]], axis=1)
        bkv = jnp.concatenate([jnp.zeros((D,), jnp.float32), p["bv"]])
        return dict(wq=bf(p["wq"] * scale), bq=p["bq"] * scale,
                    wkv=bf(wkv), bkv=bkv, wo=bf(p["wo"]), bo=p["bo"])

    blocks = []
    for blk in params["blocks"]:
        blocks.append(dict(
            attn=prep_self(blk["attn"]),
            cross=prep_cross(blk["cross"]),
            ln1_g=blk["ln1_g"], ln1_b=blk["ln1_b"],
            ln2_g=blk["ln2_g"], ln2_b=blk["ln2_b"],
            ln3_g=blk["ln3_g"], ln3_b=blk["ln3_b"],
            w1=bf(blk["w1"]), b1=blk["b1"],
            w2=bf(blk["w2"]), b2=blk["b2"],
        ))

    return dict(
        n_vocab=V,
        tok_emb_pad=bf(tok_pad),
        pos_emb=bf(params["pos_emb"]),
        blocks=blocks,
        ln_g=params["ln_g"], ln_b=params["ln_b"],
    )


# --------------------------------- main ---------------------------------------

if __name__ == "__main__":
    n_vocab, n_ctx, n_state, n_head, n_layer = 96, 8, 32, 4, 2
    n_audio_ctx = 16
    batch = 2

    key = jax.random.PRNGKey(0)
    k_params, k_tok, k_audio = jax.random.split(key, 3)

    params = init_params(k_params, n_vocab, n_ctx, n_state, n_layer)
    dparams = prepare_params(params, n_head)
    tokens = jax.random.randint(k_tok, (batch, n_ctx), 0, n_vocab, dtype=jnp.int32)
    xa = jax.random.normal(k_audio, (batch, n_audio_ctx, n_state), jnp.float32)

    logits = text_decoder_forward(tokens, xa, dparams, n_head)
    logits = jax.block_until_ready(logits)

    assert logits.shape == (batch, n_ctx, n_vocab), logits.shape
    assert logits.dtype == jnp.float32
    assert bool(jnp.all(jnp.isfinite(logits)))
    print("KERNEL_OK")
</pallas_src>

<mosaic_0001>
module attributes {stable_mosaic.version = 11 : i64} {
  func.func @_layernorm_kernel(%arg0: i32, %arg1: memref<16x32xbf16, #tpu.memory_space<vmem>>, %arg2: memref<1x32xf32, #tpu.memory_space<vmem>>, %arg3: memref<1x32xf32, #tpu.memory_space<vmem>>, %arg4: memref<16x32xbf16, #tpu.memory_space<vmem>>) attributes {dimension_semantics = [#tpu.dimension_semantics<parallel>], iteration_bounds = array<i64: 1>, scalar_prefetch = 0 : i64, scratch_operands = 0 : i64, tpu.core_type = #tpu.core_type<tc>, window_params = [{transform_indices = @transform_0, window_bounds = array<i64: 16, 32>}, {pipeline_mode = #tpu.pipeline_mode<synchronous>, transform_indices = @transform_1, window_bounds = array<i64: 1, 32>}, {pipeline_mode = #tpu.pipeline_mode<synchronous>, transform_indices = @transform_2, window_bounds = array<i64: 1, 32>}, {transform_indices = @transform_3, window_bounds = array<i64: 16, 32>}]} {
    %c0 = arith.constant 0 : index
    %c0_0 = arith.constant 0 : index
    %0 = vector.load %arg1[%c0, %c0_0] : memref<16x32xbf16, #tpu.memory_space<vmem>>, vector<16x32xbf16>
    %1 = arith.extf %0 : vector<16x32xbf16> to vector<16x32xf32>
    %cst = arith.constant dense<0.000000e+00> : vector<16xf32>
    %2 = vector.multi_reduction <add>, %1, %cst [1] : vector<16x32xf32> to vector<16xf32>
    %3 = vector.shape_cast %2 : vector<16xf32> to vector<16x1xf32>
    %cst_1 = arith.constant 3.200000e+01 : f32
    %4 = vector.broadcast %cst_1 : f32 to vector<16x1xf32>
    %5 = arith.divf %3, %4 : vector<16x1xf32>
    %6 = vector.broadcast %5 : vector<16x1xf32> to vector<16x32xf32>
    %7 = arith.subf %1, %6 : vector<16x32xf32>
    %8 = arith.mulf %7, %7 : vector<16x32xf32>
    %cst_2 = arith.constant dense<0.000000e+00> : vector<16xf32>
    %9 = vector.multi_reduction <add>, %8, %cst_2 [1] : vector<16x32xf32> to vector<16xf32>
    %10 = vector.shape_cast %9 : vector<16xf32> to vector<16x1xf32>
    %cst_3 = arith.constant 3.200000e+01 : f32
    %11 = vector.broadcast %cst_3 : f32 to vector<16x1xf32>
    %12 = arith.divf %10, %11 : vector<16x1xf32>
    %13 = vector.broadcast %5 : vector<16x1xf32> to vector<16x32xf32>
    %14 = arith.subf %1, %13 : vector<16x32xf32>
    %cst_4 = arith.constant 9.99999974E-6 : f32
    %15 = vector.broadcast %cst_4 : f32 to vector<16x1xf32>
    %16 = arith.addf %12, %15 : vector<16x1xf32>
    %17 = math.rsqrt %16 : vector<16x1xf32>
    %18 = vector.broadcast %17 : vector<16x1xf32> to vector<16x32xf32>
    %19 = arith.mulf %14, %18 : vector<16x32xf32>
    %c0_5 = arith.constant 0 : index
    %c0_6 = arith.constant 0 : index
    %20 = vector.load %arg2[%c0_5, %c0_6] : memref<1x32xf32, #tpu.memory_space<vmem>>, vector<1x32xf32>
    %21 = vector.broadcast %20 : vector<1x32xf32> to vector<16x32xf32>
    %22 = arith.mulf %19, %21 : vector<16x32xf32>
    %c0_7 = arith.constant 0 : index
    %c0_8 = arith.constant 0 : index
    %23 = vector.load %arg3[%c0_7, %c0_8] : memref<1x32xf32, #tpu.memory_space<vmem>>, vector<1x32xf32>
    %24 = vector.broadcast %23 : vector<1x32xf32> to vector<16x32xf32>
    %25 = arith.addf %22, %24 : vector<16x32xf32>
    %26 = arith.truncf %25 : vector<16x32xf32> to vector<16x32xbf16>
    %c0_9 = arith.constant 0 : index
    %c0_10 = arith.constant 0 : index
    %27 = vector.load %arg4[%c0_9, %c0_10] : memref<16x32xbf16, #tpu.memory_space<vmem>>, vector<16x32xbf16>
    tpu.vector_store %arg4[%c0_9, %c0_10], %26 {strides = array<i32>} : memref<16x32xbf16, #tpu.memory_space<vmem>>, vector<16x32xbf16>,
    return
  }
  func.func @transform_0(%arg0: i32) -> (i32, i32) {
    %c0_i32 = arith.constant 0 : i32
    %c0_i32_0 = arith.constant 0 : i32
    return %arg0, %c0_i32 : i32, i32
  }
  func.func @transform_1(%arg0: i32) -> (i32, i32) {
    %c0_i32 = arith.constant 0 : i32
    %c0_i32_0 = arith.constant 0 : i32
    %c0_i32_1 = arith.constant 0 : i32
    return %c0_i32, %c0_i32_0 : i32, i32
  }
  func.func @transform_2(%arg0: i32) -> (i32, i32) {
    %c0_i32 = arith.constant 0 : i32
    %c0_i32_0 = arith.constant 0 : i32
    %c0_i32_1 = arith.constant 0 : i32
    return %c0_i32, %c0_i32_0 : i32, i32
  }
  func.func @transform_3(%arg0: i32) -> (i32, i32) {
    %c0_i32 = arith.constant 0 : i32
    %c0_i32_0 = arith.constant 0 : i32
    return %arg0, %c0_i32 : i32, i32
  }
}

</mosaic_0001>

<llo_original>
// kernel: tpu_custom_call.1
$region0: #{tpu_custom_call.1}
  #allocation0 [shape = 'u32[]', space=smem, size = 0x4, offset = 0x4, fixed_abs, tag = 'smem constant byte address 0x4 - core index']
  #allocation1 [shape = 'u32[144,128]{1,0:T(1,128)}', space=vmem, size = 0x12000, scoped, tag = 'internal scratch']
  %s0 = inlined_call_operand.hbm [shape: bf16[16,32], index: 0, kind: input, shape index: {}]
  %s1 = inlined_call_operand.vmem [shape: f32[1,32], index: 1, kind: input, shape index: {}]
  %s2 = inlined_call_operand.vmem [shape: f32[1,32], index: 2, kind: input, shape index: {}]
  %s3 = inlined_call_operand.hbm [shape: bf16[16,32], index: 3, kind: output, shape index: {}]
  %s4 = sld [smem:[#allocation0]]
  $region26: #{tpu_custom_call.1} parent=0
    _
  %s6 = ssub.s32 1, %s4
  %s7 = scalar_select 0, %s6, %s4
  $region1: #{tpu_custom_call.1} parent=0
    #allocation2 [shape = 'u8[4096]{0}', space=vmem, size = 0x1000, scoped, tag = 'input window, operand 0, single buffered']
    #allocation3 [shape = 's32[1]{0}', space=sflag, size = 0x4, scoped, tag = 'scoped memory for tpu_custom_call.1']
    #allocation4 [shape = 's32[1]{0}', space=sflag, size = 0x4, scoped, tag = 'scoped memory for tpu_custom_call.1']
    #allocation5 [shape = 'u8[4096]{0}', space=vmem, size = 0x1000, scoped, tag = 'output window, operand 0, single buffered']
    %8 = vsyncpa [#allocation3], 0
    %9 = vsyncpa [#allocation4], 0
    // Predicated region
    $region2: #{tpu_custom_call.1} parent=1 // pred_check
      _
    $region3: #{tpu_custom_call.1} parent=1 // pred_check_branch
      %11 = sbr.rel (0) target = $region5
    $region4: #{tpu_custom_call.1} parent=1 // pred_region
      %s13 = ssub.s32 128, 128
      %14 = vsyncadd [#allocation3], %s13
      %s15 = sshll.u32 [#allocation2], 4
      %s16 = int_to_ptr.vmem [resolvable:$true] %s15
      %21 = dma.hbm_to_vmem [thread:$0]  %s0, 128, %s16, [#allocation3], 64, 64, 4
    $region5: #{tpu_custom_call.1} parent=1 // pred_fallthru
      _
    // Predicated region
    $region6: #{tpu_custom_call.1} parent=1 // pred_check
      _
    $region7: #{tpu_custom_call.1} parent=1 // pred_check_branch
      %23 = sbr.rel (0) target = $region9
    $region8: #{tpu_custom_call.1} parent=1 // pred_region
      _
    $region9: #{tpu_custom_call.1} parent=1 // pred_fallthru
      _
    // Predicated region
    $region10: #{tpu_custom_call.1} parent=1 // pred_check
      _
    $region11: #{tpu_custom_call.1} parent=1 // pred_check_branch
      %25 = sbr.rel (0) target = $region13
    $region12: #{tpu_custom_call.1} parent=1 // pred_region
      _
    $region13: #{tpu_custom_call.1} parent=1 // pred_fallthru
      _
    // Predicated region
    $region14: #{tpu_custom_call.1} parent=1 // pred_check
      _
    $region15: #{tpu_custom_call.1} parent=1 // pred_check_branch
      %27 = sbr.rel (0) target = $region17
    $region16: #{tpu_custom_call.1} parent=1 // pred_region
      %28 = dma.done [#allocation3], 128
    $region17: #{tpu_custom_call.1} parent=1 // pred_fallthru
      _
    %v29 = vld [vmem:[#allocation2] sm:$0xf]
    %v30 = vld [vmem:[#allocation2 + $0x4] sm:$0xf]
    %v31 = vunpack.c.l.bf16 %v29
    %v32 = vunpack.c.l.bf16 %v30
    %vm33 = vcmask 261120
    %v34 = vsel %vm33, %v31, 0.0
    %35 = vadd.xlane.f32.xlu0 %v34
    %v36 = vpop.xlane.xlu0 %35
    %v37 = vsel %vm33, %v32, 0.0
    %38 = vadd.xlane.f32.xlu0 %v37
    %v39 = vpop.xlane.xlu0 %38
    %v40 = vrcp.pop 32.0
    %v41 = vmul.f32 %v36, %v40
    %v42 = vmul.f32 %v39, %v40
    %v43 = vsub.f32 %v31, %v41
    %v44 = vsub.f32 %v32, %v42
    %v45 = vmul.f32 %v43, %v43
    %v46 = vmul.f32 %v44, %v44
    %v47 = vsel %vm33, %v45, 0.0
    %48 = vadd.xlane.f32.xlu0 %v47
    %v49 = vpop.xlane.xlu0 %48
    %v50 = vsel %vm33, %v46, 0.0
    %51 = vadd.xlane.f32.xlu0 %v50
    %v52 = vpop.xlane.xlu0 %51
    %v53 = vmul.f32 %v49, %v40
    %v54 = vmul.f32 %v52, %v40
    %v55 = vadd.f32 %v53, 1e-05
    %v56 = vadd.f32 %v54, 1e-05
    %v57 = vrsqrt.pop %v55
    %v58 = vrsqrt.pop %v56
    %v59 = vmul.f32 %v43, %v57
    %v60 = vmul.f32 %v44, %v58
    %v61 = vld [vmem:[%s1] sm:$0x1]
    %v63 = vlaneseq
    %v64 = vshrl.u32 %v63, 7
    %v65 = vsub.s32 0, %v64
    %v66 = vrot.slane %v61, %v65
    %v68 = vmul.f32 %v59, %v66
    %v69 = vmul.f32 %v60, %v66
    %v70 = vld [vmem:[%s2] sm:$0x1]
    %v72 = vlaneseq
    %v73 = vshrl.u32 %v72, 7
    %v74 = vsub.s32 0, %v73
    %v75 = vrot.slane %v70, %v74
    %v77 = vadd.f32 %v68, %v75
    %v78 = vadd.f32 %v69, %v75
    %v79 = vpack.c.bf16 %v78, %v77
    %v81 = vunpack.c.l.b16 %v79
    %v82 = vunpack.c.h.b16 %v79
    %v83 = vpack.c.b16 %v81, %v81
    %v84 = vpack.c.b16 %v82, %v82
    %vm87 = vcmask 257024
    %88 = vst.msk [vmem:[#allocation5] sm:$0xf] %vm87, %v83
    %89 = vst.msk [vmem:[#allocation5 + $0x4] sm:$0xf] %vm87, %v84
    // Predicated region
    $region18: #{tpu_custom_call.1} parent=1 // pred_check
      _
    $region19: #{tpu_custom_call.1} parent=1 // pred_check_branch
      %91 = sbr.rel (0) target = $region21
    $region20: #{tpu_custom_call.1} parent=1 // pred_region
      %s93 = ssub.s32 128, 128
      %94 = vsyncadd [#allocation4], %s93
      %s95 = sshll.u32 [#allocation5], 4
      %s96 = int_to_ptr.vmem [resolvable:$true] %s95
      %101 = dma.vmem_to_hbm [thread:$0]  %s96, 128, %s3, [#allocation4], 64, 64, 4
    $region21: #{tpu_custom_call.1} parent=1 // pred_fallthru
      _
    // Predicated region
    $region22: #{tpu_custom_call.1} parent=1 // pred_check
      _
    $region23: #{tpu_custom_call.1} parent=1 // pred_check_branch
      %103 = sbr.rel (0) target = $region25
    $region24: #{tpu_custom_call.1} parent=1 // pred_region
      %104 = dma.done [#allocation4], 128
    $region25: #{tpu_custom_call.1} parent=1 // pred_fallthru
      _
    %105 = vsyncpa [#allocation3], 1
    %106 = vsyncpa [#allocation4], 1

</llo_original>
